<compile_context>
chip_gen: v7x
topology: tpu7x:2x2x1
jax: 0.10.0
libtpu: 0.0.40
codegen_flags: <defaults>
</compile_context>

<pallas_src>
import functools

import jax
import jax.numpy as jnp
from jax.experimental import pallas as pl
from jax.experimental.pallas import tpu as pltpu

LANE = 128      # vreg lane width; hidden/output feature dims live in 128 lanes
HIDDEN = 32     # QNetwork hidden size

# Packed-parameter slab layout (all rows are 128 lanes wide, f32):
#   rows [  0:  8)  W1   rows [0:state_shape) x cols [0:32) real, rest zeros
#   row     8       b1   cols [0:32)
#   row     9       b2   cols [0:32)
#   row    10       b3   cols [0:action_size)      (rows 11..15 pad)
#   rows [ 16:144)  W2   rows [16:48) x cols [0:32) real, rest zeros
#   rows [144:272)  W3   rows [144:176) x cols [0:action_size) real, rest zeros
_W1_ROW = 0
_B1_ROW, _B2_ROW, _B3_ROW = 8, 9, 10
_W2_ROW = 16
_W3_ROW = 144
_SLAB_ROWS = 272          # multiple of 8 -> clean (8,128) tiling, 136 KiB


def qnetwork_kernel(x_ref, p_ref, o_ref):
    s_dim = x_ref.shape[1]          # state_shape (static, <= 8)
    a_dim = o_ref.shape[1]          # action_size (static)

    x = x_ref[...]                                  # (TB, S) unpadded features

    b1 = p_ref[_B1_ROW:_B1_ROW + 1, :]              # (1, 128)
    b2 = p_ref[_B2_ROW:_B2_ROW + 1, :]
    b3 = p_ref[_B3_ROW:_B3_ROW + 1, :]

    # Layer 1: contraction length is only state_shape, so do it on the VPU
    # with broadcast-FMAs against the first S rows of the W1 block.  This is
    # free filler under the DMA-bound regime and lets x stay (B, S) end to end.
    h1 = x[:, 0:1] * p_ref[_W1_ROW:_W1_ROW + 1, :]              # (TB, 128)
    for s in range(1, s_dim):
        h1 = h1 + x[:, s:s + 1] * p_ref[_W1_ROW + s:_W1_ROW + s + 1, :]
    h1 = jnp.maximum(h1 + b1, 0.0)     # lanes [32:128) stay exactly zero

    # Layers 2/3 on the MXU (aligned 128x128 tiles).  Zero K-rows beyond 32
    # in W2/W3 keep the contraction exact.
    w2 = p_ref[_W2_ROW:_W2_ROW + LANE, :]           # (128, 128)
    w3 = p_ref[_W3_ROW:_W3_ROW + LANE, :]           # (128, 128)
    h2 = jnp.maximum(
        jnp.dot(h1, w2, preferred_element_type=jnp.float32) + b2, 0.0)
    out = jnp.dot(h2, w3, preferred_element_type=jnp.float32) + b3

    # Narrow store: only the action_size meaningful lanes hit HBM.
    o_ref[...] = out[:, :a_dim].astype(o_ref.dtype)


def pack_params(params, state_shape, action_size):
    """Pack all weights/biases into one zero-padded (272, 128) f32 slab."""
    assert state_shape <= 8 and action_size <= HIDDEN
    slab = jnp.zeros((_SLAB_ROWS, LANE), jnp.float32)
    slab = slab.at[_W1_ROW:_W1_ROW + state_shape, :HIDDEN].set(params["w1"])
    slab = slab.at[_B1_ROW, :HIDDEN].set(params["b1"].reshape(-1))
    slab = slab.at[_B2_ROW, :HIDDEN].set(params["b2"].reshape(-1))
    slab = slab.at[_B3_ROW, :action_size].set(params["b3"].reshape(-1))
    slab = slab.at[_W2_ROW:_W2_ROW + HIDDEN, :HIDDEN].set(params["w2"])
    slab = slab.at[_W3_ROW:_W3_ROW + HIDDEN, :action_size].set(params["w3"])
    return slab


@functools.partial(jax.jit, static_argnames=("action_size", "tile_b"))
def qnetwork_forward(x, slab, *, action_size, tile_b=1024):
    """x: (B, state_shape) f32.  slab: packed parameters from pack_params."""
    B, S = x.shape

    if B <= tile_b:
        # Inference / modest replay batch: single block, no grid, no padding.
        return pl.pallas_call(
            qnetwork_kernel,
            out_shape=jax.ShapeDtypeStruct((B, action_size), jnp.float32),
            in_specs=[pl.BlockSpec((B, S), lambda: (0, 0)),
                      pl.BlockSpec((_SLAB_ROWS, LANE), lambda: (0, 0))],
            out_specs=pl.BlockSpec((B, action_size), lambda: (0, 0)),
        )(x, slab)

    # Large batch: tile the batch axis.  Weights stay VMEM-resident (constant
    # index_map).  Round the block count up to an even number so the parallel
    # batch axis splits evenly across v7x's 2 TensorCores.
    nb = pl.cdiv(B, tile_b)
    if nb % 2:
        nb += 1
    tb = ((B + nb - 1) // nb + 7) // 8 * 8          # rows per block, mult of 8
    bp = nb * tb
    # Row-pad with zeros only if needed.  Pad rows produce relu(b)-derived
    # junk inside the kernel; that is discarded by out[:B] below -- keep that
    # slice if the output layout ever changes.
    x_in = x if bp == B else jnp.zeros((bp, S), x.dtype).at[:B].set(x)

    out = pl.pallas_call(
        qnetwork_kernel,
        out_shape=jax.ShapeDtypeStruct((bp, action_size), jnp.float32),
        grid=(nb,),
        in_specs=[pl.BlockSpec((tb, S), lambda i: (i, 0)),
                  pl.BlockSpec((_SLAB_ROWS, LANE), lambda i: (0, 0))],
        out_specs=pl.BlockSpec((tb, action_size), lambda i: (i, 0)),
        compiler_params=pltpu.CompilerParams(
            dimension_semantics=("parallel",)),
    )(x_in, slab)
    return out[:B]


def init_params(key, state_shape, action_size, hidden=HIDDEN):
    """Deterministic init mimicking PyTorch nn.Linear default
    (uniform in +/- 1/sqrt(fan_in)).  Weights stored as (in, out)."""
    def linear(k, fan_in, fan_out):
        kw, kb = jax.random.split(k)
        bound = 1.0 / jnp.sqrt(fan_in)
        w = jax.random.uniform(kw, (fan_in, fan_out), jnp.float32,
                               -bound, bound)
        b = jax.random.uniform(kb, (fan_out,), jnp.float32, -bound, bound)
        return w, b

    k1, k2, k3 = jax.random.split(key, 3)
    w1, b1 = linear(k1, state_shape, hidden)
    w2, b2 = linear(k2, hidden, hidden)
    w3, b3 = linear(k3, hidden, action_size)
    return {"w1": w1, "b1": b1, "w2": w2, "b2": b2, "w3": w3, "b3": b3}


def reference_forward(x, p):
    h1 = jnp.maximum(x @ p["w1"] + p["b1"], 0.0)
    h2 = jnp.maximum(h1 @ p["w2"] + p["b2"], 0.0)
    return h2 @ p["w3"] + p["b3"]


if __name__ == "__main__":
    key = jax.random.PRNGKey(0)
    k_params, k_x1, k_x2 = jax.random.split(key, 3)

    state_shape, action_size = 4, 2
    params = init_params(k_params, state_shape, action_size)
    slab = pack_params(params, state_shape, action_size)

    # Small inference-style batch -> single-block (grid=()) path.
    x_small = jax.random.normal(k_x1, (8, state_shape), jnp.float32)
    out_small = jax.block_until_ready(
        qnetwork_forward(x_small, slab, action_size=action_size))
    ref_small = reference_forward(x_small, params)
    assert out_small.shape == (8, action_size)
    assert jnp.allclose(out_small, ref_small, atol=1e-4, rtol=1e-4), \
        "small-batch mismatch vs reference"

    # Replay-style batch -> tiled grid path (small tile_b here only to
    # exercise the gridded/balanced code path at modest shapes; the
    # production default is tile_b=1024).
    x_big = jax.random.normal(k_x2, (300, state_shape), jnp.float32)
    out_big = jax.block_until_ready(
        qnetwork_forward(x_big, slab, action_size=action_size, tile_b=64))
    ref_big = reference_forward(x_big, params)
    assert out_big.shape == (300, action_size)
    assert jnp.allclose(out_big, ref_big, atol=1e-4, rtol=1e-4), \
        "large-batch mismatch vs reference"

    print("KERNEL_OK")
</pallas_src>

<mosaic_0001>
module attributes {stable_mosaic.version = 11 : i64} {
  func.func @qnetwork_kernel(%arg0: memref<8x4xf32, #tpu.memory_space<vmem>>, %arg1: memref<272x128xf32, #tpu.memory_space<vmem>>, %arg2: memref<8x2xf32, #tpu.memory_space<vmem>>) attributes {dimension_semantics = [], scalar_prefetch = 0 : i64, scratch_operands = 0 : i64, tpu.core_type = #tpu.core_type<tc>} {
    %c0 = arith.constant 0 : index
    %c0_0 = arith.constant 0 : index
    %0 = vector.load %arg0[%c0, %c0_0] : memref<8x4xf32, #tpu.memory_space<vmem>>, vector<8x4xf32>
    %c8 = arith.constant 8 : index
    %c0_1 = arith.constant 0 : index
    %1 = vector.load %arg1[%c8, %c0_1] : memref<272x128xf32, #tpu.memory_space<vmem>>, vector<1x128xf32>
    %c9 = arith.constant 9 : index
    %c0_2 = arith.constant 0 : index
    %2 = vector.load %arg1[%c9, %c0_2] : memref<272x128xf32, #tpu.memory_space<vmem>>, vector<1x128xf32>
    %c10 = arith.constant 10 : index
    %c0_3 = arith.constant 0 : index
    %3 = vector.load %arg1[%c10, %c0_3] : memref<272x128xf32, #tpu.memory_space<vmem>>, vector<1x128xf32>
    %4 = vector.extract_strided_slice %0 {offsets = [0, 0], sizes = [8, 1], strides = [1, 1]} : vector<8x4xf32> to vector<8x1xf32>
    %c0_4 = arith.constant 0 : index
    %c0_5 = arith.constant 0 : index
    %5 = vector.load %arg1[%c0_4, %c0_5] : memref<272x128xf32, #tpu.memory_space<vmem>>, vector<1x128xf32>
    %6 = vector.broadcast %4 : vector<8x1xf32> to vector<8x128xf32>
    %7 = vector.broadcast %5 : vector<1x128xf32> to vector<8x128xf32>
    %8 = arith.mulf %6, %7 : vector<8x128xf32>
    %9 = vector.extract_strided_slice %0 {offsets = [0, 1], sizes = [8, 1], strides = [1, 1]} : vector<8x4xf32> to vector<8x1xf32>
    %c1 = arith.constant 1 : index
    %c0_6 = arith.constant 0 : index
    %10 = vector.load %arg1[%c1, %c0_6] : memref<272x128xf32, #tpu.memory_space<vmem>>, vector<1x128xf32>
    %11 = vector.broadcast %9 : vector<8x1xf32> to vector<8x128xf32>
    %12 = vector.broadcast %10 : vector<1x128xf32> to vector<8x128xf32>
    %13 = arith.mulf %11, %12 : vector<8x128xf32>
    %14 = arith.addf %8, %13 : vector<8x128xf32>
    %15 = vector.extract_strided_slice %0 {offsets = [0, 2], sizes = [8, 1], strides = [1, 1]} : vector<8x4xf32> to vector<8x1xf32>
    %c2 = arith.constant 2 : index
    %c0_7 = arith.constant 0 : index
    %16 = vector.load %arg1[%c2, %c0_7] : memref<272x128xf32, #tpu.memory_space<vmem>>, vector<1x128xf32>
    %17 = vector.broadcast %15 : vector<8x1xf32> to vector<8x128xf32>
    %18 = vector.broadcast %16 : vector<1x128xf32> to vector<8x128xf32>
    %19 = arith.mulf %17, %18 : vector<8x128xf32>
    %20 = arith.addf %14, %19 : vector<8x128xf32>
    %21 = vector.extract_strided_slice %0 {offsets = [0, 3], sizes = [8, 1], strides = [1, 1]} : vector<8x4xf32> to vector<8x1xf32>
    %c3 = arith.constant 3 : index
    %c0_8 = arith.constant 0 : index
    %22 = vector.load %arg1[%c3, %c0_8] : memref<272x128xf32, #tpu.memory_space<vmem>>, vector<1x128xf32>
    %23 = vector.broadcast %21 : vector<8x1xf32> to vector<8x128xf32>
    %24 = vector.broadcast %22 : vector<1x128xf32> to vector<8x128xf32>
    %25 = arith.mulf %23, %24 : vector<8x128xf32>
    %26 = arith.addf %20, %25 : vector<8x128xf32>
    %27 = vector.broadcast %1 : vector<1x128xf32> to vector<8x128xf32>
    %28 = arith.addf %26, %27 : vector<8x128xf32>
    %cst = arith.constant 0.000000e+00 : f32
    %29 = vector.broadcast %cst : f32 to vector<8x128xf32>
    %30 = arith.maximumf %28, %29 : vector<8x128xf32>
    %c16 = arith.constant 16 : index
    %c0_9 = arith.constant 0 : index
    %31 = vector.load %arg1[%c16, %c0_9] : memref<272x128xf32, #tpu.memory_space<vmem>>, vector<128x128xf32>
    %c144 = arith.constant 144 : index
    %c0_10 = arith.constant 0 : index
    %32 = vector.load %arg1[%c144, %c0_10] : memref<272x128xf32, #tpu.memory_space<vmem>>, vector<128x128xf32>
    %cst_11 = arith.constant dense<0.000000e+00> : vector<8x128xf32>
    %33 = tpu.matmul %30, %31, %cst_11 {dimension_numbers = #tpu.dot_dimension_numbers<[1], [0], [0], [1], [0, 0, 1, 1], [], []>} : vector<8x128xf32>, vector<128x128xf32>, vector<8x128xf32> -> vector<8x128xf32>
    %34 = vector.broadcast %2 : vector<1x128xf32> to vector<8x128xf32>
    %35 = arith.addf %33, %34 : vector<8x128xf32>
    %cst_12 = arith.constant 0.000000e+00 : f32
    %36 = vector.broadcast %cst_12 : f32 to vector<8x128xf32>
    %37 = arith.maximumf %35, %36 : vector<8x128xf32>
    %cst_13 = arith.constant dense<0.000000e+00> : vector<8x128xf32>
    %38 = tpu.matmul %37, %32, %cst_13 {dimension_numbers = #tpu.dot_dimension_numbers<[1], [0], [0], [1], [0, 0, 1, 1], [], []>} : vector<8x128xf32>, vector<128x128xf32>, vector<8x128xf32> -> vector<8x128xf32>
    %39 = vector.broadcast %3 : vector<1x128xf32> to vector<8x128xf32>
    %40 = arith.addf %38, %39 : vector<8x128xf32>
    %41 = vector.extract_strided_slice %40 {offsets = [0, 0], sizes = [8, 2], strides = [1, 1]} : vector<8x128xf32> to vector<8x2xf32>
    %c0_14 = arith.constant 0 : index
    %c0_15 = arith.constant 0 : index
    %42 = vector.load %arg2[%c0_14, %c0_15] : memref<8x2xf32, #tpu.memory_space<vmem>>, vector<8x2xf32>
    tpu.vector_store %arg2[%c0_14, %c0_15], %41 {strides = array<i32>} : memref<8x2xf32, #tpu.memory_space<vmem>>, vector<8x2xf32>,
    return
  }
}

</mosaic_0001>

<llo_original>
// kernel: qnetwork_forward.1
$region0: #{qnetwork_forward.1}
  #allocation0 [shape = 'u32[]', space=smem, size = 0x4, offset = 0x4, fixed_abs, tag = 'smem constant byte address 0x4 - core index']
  #allocation1 [shape = 'u32[144,128]{1,0:T(1,128)}', space=vmem, size = 0x12000, scoped, tag = 'internal scratch']
  %s0 = inlined_call_operand.vmem [shape: f32[8,4], index: 0, kind: input, shape index: {}]
  %s1 = inlined_call_operand.hbm [shape: f32[272,128], index: 1, kind: input, shape index: {}]
  %s2 = inlined_call_operand.vmem [shape: f32[8,2], index: 2, kind: output, shape index: {}]
  %s3 = sld [smem:[#allocation0]]
  $region22: #{qnetwork_forward.1} parent=0
    _
  %s5 = ssub.s32 1, %s3
  %s6 = scalar_select 0, %s5, %s3
  $region1: #{qnetwork_forward.1} parent=0
    #allocation2 [shape = 'u8[139264]{0}', space=vmem, size = 0x22000, scoped, tag = 'input window, operand 1, single buffered']
    #allocation3 [shape = 's32[1]{0}', space=sflag, size = 0x4, scoped, tag = 'scoped memory for qnetwork_forward.1']
    %7 = vsyncpa [#allocation3], 0
    // Predicated region
    $region2: #{qnetwork_forward.1} parent=1 // pred_check
      _
    $region3: #{qnetwork_forward.1} parent=1 // pred_check_branch
      %9 = sbr.rel (0) target = $region5
    $region4: #{qnetwork_forward.1} parent=1 // pred_region
      _
    $region5: #{qnetwork_forward.1} parent=1 // pred_fallthru
      _
    // Predicated region
    $region6: #{qnetwork_forward.1} parent=1 // pred_check
      _
    $region7: #{qnetwork_forward.1} parent=1 // pred_check_branch
      %11 = sbr.rel (0) target = $region9
    $region8: #{qnetwork_forward.1} parent=1 // pred_region
      %s13 = ssub.s32 4352, 4352
      %14 = vsyncadd [#allocation3], %s13
      %s15 = sshll.u32 [#allocation2], 4
      %s16 = int_to_ptr.vmem [resolvable:$true] %s15
      %21 = dma.hbm_to_vmem [thread:$0]  %s1, 4352, %s16, [#allocation3], 128, 128, 8
    $region9: #{qnetwork_forward.1} parent=1 // pred_fallthru
      _
    // Predicated region
    $region10: #{qnetwork_forward.1} parent=1 // pred_check
      _
    $region11: #{qnetwork_forward.1} parent=1 // pred_check_branch
      %23 = sbr.rel (0) target = $region13
    $region12: #{qnetwork_forward.1} parent=1 // pred_region
      %24 = dma.done [#allocation3], 4352
    $region13: #{qnetwork_forward.1} parent=1 // pred_fallthru
      _
    %v25 = vld [vmem:[%s0] sm:$0xff]
    %v26 = vld [vmem:[#allocation2 + $0x8] sm:$0x1]
    %v27 = vld [vmem:[#allocation2 + $0x9] sm:$0x1]
    %v28 = vld [vmem:[#allocation2 + $0xa] sm:$0x1]
    %v29 = vld [vmem:[#allocation2] sm:$0x1]
    %31 = vset.pattern.permute.xlu0 0
    %32 = vperm.xlu0 %31, %v25
    %v33 = vpop.permute.xlu0 %32
    %v35 = vlaneseq
    %v36 = vshrl.u32 %v35, 7
    %v37 = vsub.s32 0, %v36
    %v38 = vrot.slane %v29, %v37
    %v39 = vmul.f32 %v33, %v38
    %v40 = vld [vmem:[#allocation2 + $0x1] sm:$0x1]
    %41 = vset.pattern.permute.xlu0 1
    %42 = vperm.xlu0 %41, %v25
    %v43 = vpop.permute.xlu0 %42
    %v45 = vlaneseq
    %v46 = vshrl.u32 %v45, 7
    %v47 = vsub.s32 0, %v46
    %v48 = vrot.slane %v40, %v47
    %v49 = vmul.f32 %v43, %v48
    %v50 = vadd.f32 %v39, %v49
    %v51 = vld [vmem:[#allocation2 + $0x2] sm:$0x1]
    %52 = vset.pattern.permute.xlu0 2
    %53 = vperm.xlu0 %52, %v25
    %v54 = vpop.permute.xlu0 %53
    %v56 = vlaneseq
    %v57 = vshrl.u32 %v56, 7
    %v58 = vsub.s32 0, %v57
    %v59 = vrot.slane %v51, %v58
    %v60 = vmul.f32 %v54, %v59
    %v61 = vadd.f32 %v50, %v60
    %v62 = vld [vmem:[#allocation2 + $0x3] sm:$0x1]
    %63 = vset.pattern.permute.xlu0 3
    %64 = vperm.xlu0 %63, %v25
    %v65 = vpop.permute.xlu0 %64
    %v67 = vlaneseq
    %v68 = vshrl.u32 %v67, 7
    %v69 = vsub.s32 0, %v68
    %v70 = vrot.slane %v62, %v69
    %v71 = vmul.f32 %v65, %v70
    %v72 = vadd.f32 %v61, %v71
    %v73 = vlaneseq
    %v74 = vshrl.u32 %v73, 7
    %v75 = vsub.s32 0, %v74
    %v76 = vrot.slane %v26, %v75
    %v77 = vadd.f32 %v72, %v76
    %v78 = vmax.f32 %v77, 0.0
    %v79 = vld [vmem:[#allocation2 + $0x10] sm:$0xff]
    %v80 = vld [vmem:[#allocation2 + $0x18] sm:$0xff]
    %v81 = vld [vmem:[#allocation2 + $0x20] sm:$0xff]
    %v82 = vld [vmem:[#allocation2 + $0x28] sm:$0xff]
    %v83 = vld [vmem:[#allocation2 + $0x30] sm:$0xff]
    %v84 = vld [vmem:[#allocation2 + $0x38] sm:$0xff]
    %v85 = vld [vmem:[#allocation2 + $0x40] sm:$0xff]
    %v86 = vld [vmem:[#allocation2 + $0x48] sm:$0xff]
    %v87 = vld [vmem:[#allocation2 + $0x50] sm:$0xff]
    %v88 = vld [vmem:[#allocation2 + $0x58] sm:$0xff]
    %v89 = vld [vmem:[#allocation2 + $0x60] sm:$0xff]
    %v90 = vld [vmem:[#allocation2 + $0x68] sm:$0xff]
    %v91 = vld [vmem:[#allocation2 + $0x70] sm:$0xff]
    %v92 = vld [vmem:[#allocation2 + $0x78] sm:$0xff]
    %v93 = vld [vmem:[#allocation2 + $0x80] sm:$0xff]
    %v94 = vld [vmem:[#allocation2 + $0x88] sm:$0xff]
    %v95 = vld [vmem:[#allocation2 + $0x90] sm:$0xff]
    %v96 = vld [vmem:[#allocation2 + $0x98] sm:$0xff]
    %v97 = vld [vmem:[#allocation2 + $0xa0] sm:$0xff]
    %v98 = vld [vmem:[#allocation2 + $0xa8] sm:$0xff]
    %v99 = vld [vmem:[#allocation2 + $0xb0] sm:$0xff]
    %v100 = vld [vmem:[#allocation2 + $0xb8] sm:$0xff]
    %v101 = vld [vmem:[#allocation2 + $0xc0] sm:$0xff]
    %v102 = vld [vmem:[#allocation2 + $0xc8] sm:$0xff]
    %v103 = vld [vmem:[#allocation2 + $0xd0] sm:$0xff]
    %v104 = vld [vmem:[#allocation2 + $0xd8] sm:$0xff]
    %v105 = vld [vmem:[#allocation2 + $0xe0] sm:$0xff]
    %v106 = vld [vmem:[#allocation2 + $0xe8] sm:$0xff]
    %v107 = vld [vmem:[#allocation2 + $0xf0] sm:$0xff]
    %v108 = vld [vmem:[#allocation2 + $0xf8] sm:$0xff]
    %v109 = vld [vmem:[#allocation2 + $0x100] sm:$0xff]
    %v110 = vld [vmem:[#allocation2 + $0x108] sm:$0xff]
    %v111 = vlaneseq
    %v112 = vshrl.u32 %v111, 7
    %v113 = vsub.s32 0, %v112
    %v114 = vrot.slane %v27, %v113
    %115 = vmatprep.subr.mxu0 0.0
    %116 = vmatpush1.msra.mxu0 %v79
    %117 = vmatprep.subr.mxu0 0.0
    %118 = vmatpush1.msra.mxu0 %v80
    %119 = vmatprep.subr.mxu0 0.0
    %120 = vmatpush1.msra.mxu0 %v81
    %121 = vmatprep.subr.mxu0 0.0
    %122 = vmatpush1.msra.mxu0 %v82
    %123 = vmatprep.subr.mxu0 0.0
    %124 = vmatpush1.msra.mxu0 %v83
    %125 = vmatprep.subr.mxu0 0.0
    %126 = vmatpush1.msra.mxu0 %v84
    %127 = vmatprep.subr.mxu0 0.0
    %128 = vmatpush1.msra.mxu0 %v85
    %129 = vmatprep.subr.mxu0 0.0
    %130 = vmatpush1.msra.mxu0 %v86
    %131 = vmatprep.subr.mxu0 0.0
    %132 = vmatpush1.msra.mxu0 %v87
    %133 = vmatprep.subr.mxu0 0.0
    %134 = vmatpush1.msra.mxu0 %v88
    %135 = vmatprep.subr.mxu0 0.0
    %136 = vmatpush1.msra.mxu0 %v89
    %137 = vmatprep.subr.mxu0 0.0
    %138 = vmatpush1.msra.mxu0 %v90
    %139 = vmatprep.subr.mxu0 0.0
    %140 = vmatpush1.msra.mxu0 %v91
    %141 = vmatprep.subr.mxu0 0.0
    %142 = vmatpush1.msra.mxu0 %v92
    %143 = vmatprep.subr.mxu0 0.0
    %144 = vmatpush1.msra.mxu0 %v93
    %145 = vmatprep.subr.mxu0 0.0
    %146 = vmatpush1.msra.mxu0 %v94
    %147 = vmatprep.subr.mxu0 0.0
    %148 = vmatpush1.msra.mxu0 0.0
    %149 = vmatprep.subr.mxu0 0.0
    %150 = vmatpush1.msra.mxu0 0.0
    %151 = vmatprep.subr.mxu0 0.0
    %152 = vmatpush1.msra.mxu0 0.0
    %153 = vmatprep.subr.mxu0 0.0
    %154 = vmatpush1.msra.mxu0 0.0
    %155 = vmatprep.subr.mxu0 0.0
    %156 = vmatpush1.msra.mxu0 0.0
    %157 = vmatprep.subr.mxu0 0.0
    %158 = vmatpush1.msra.mxu0 0.0
    %159 = vmatprep.subr.mxu0 0.0
    %160 = vmatpush1.msra.mxu0 0.0
    %161 = vmatprep.subr.mxu0 0.0
    %162 = vmatpush1.msra.mxu0 0.0
    %163 = vmatprep.subr.mxu0 0.0
    %164 = vmatpush1.msra.mxu0 0.0
    %165 = vmatprep.subr.mxu0 0.0
    %166 = vmatpush1.msra.mxu0 0.0
    %167 = vmatprep.subr.mxu0 0.0
    %168 = vmatpush1.msra.mxu0 0.0
    %169 = vmatprep.subr.mxu0 0.0
    %170 = vmatpush1.msra.mxu0 0.0
    %171 = vmatprep.subr.mxu0 0.0
    %172 = vmatpush1.msra.mxu0 0.0
    %173 = vmatprep.subr.mxu0 0.0
    %174 = vmatpush1.msra.mxu0 0.0
    %175 = vmatprep.subr.mxu0 0.0
    %176 = vmatpush1.msra.mxu0 0.0
    %177 = vmatprep.subr.mxu0 0.0
    %178 = vmatpush1.msra.mxu0 0.0
    %179 = vmatprep.mubr.f32.mxu0 0.0
    %180 = vmatmul.mubr.f32.gmra.mrb[0].mxu0 %v78
    %v181 = vpop.f32.mrb[0].mxu0
    %v182 = vadd.f32 %v114, %v181
    %v183 = vpop.f32.mrb[0].mxu0
    %184 = vdwg.mxu0
    %v185 = vmax.f32 %v182, 0.0
    %v186 = vlaneseq
    %v187 = vshrl.u32 %v186, 7
    %v188 = vsub.s32 0, %v187
    %v189 = vrot.slane %v28, %v188
    %190 = vmatprep.subr.mxu0 0.0
    %191 = vmatpush1.msra.mxu0 %v95
    %192 = vmatprep.subr.mxu0 0.0
    %193 = vmatpush1.msra.mxu0 %v96
    %194 = vmatprep.subr.mxu0 0.0
    %195 = vmatpush1.msra.mxu0 %v97
    %196 = vmatprep.subr.mxu0 0.0
    %197 = vmatpush1.msra.mxu0 %v98
    %198 = vmatprep.subr.mxu0 0.0
    %199 = vmatpush1.msra.mxu0 %v99
    %200 = vmatprep.subr.mxu0 0.0
    %201 = vmatpush1.msra.mxu0 %v100
    %202 = vmatprep.subr.mxu0 0.0
    %203 = vmatpush1.msra.mxu0 %v101
    %204 = vmatprep.subr.mxu0 0.0
    %205 = vmatpush1.msra.mxu0 %v102
    %206 = vmatprep.subr.mxu0 0.0
    %207 = vmatpush1.msra.mxu0 %v103
    %208 = vmatprep.subr.mxu0 0.0
    %209 = vmatpush1.msra.mxu0 %v104
    %210 = vmatprep.subr.mxu0 0.0
    %211 = vmatpush1.msra.mxu0 %v105
    %212 = vmatprep.subr.mxu0 0.0
    %213 = vmatpush1.msra.mxu0 %v106
    %214 = vmatprep.subr.mxu0 0.0
    %215 = vmatpush1.msra.mxu0 %v107
    %216 = vmatprep.subr.mxu0 0.0
    %217 = vmatpush1.msra.mxu0 %v108
    %218 = vmatprep.subr.mxu0 0.0
    %219 = vmatpush1.msra.mxu0 %v109
    %220 = vmatprep.subr.mxu0 0.0
    %221 = vmatpush1.msra.mxu0 %v110
    %222 = vmatprep.subr.mxu0 0.0
    %223 = vmatpush1.msra.mxu0 0.0
    %224 = vmatprep.subr.mxu0 0.0
    %225 = vmatpush1.msra.mxu0 0.0
    %226 = vmatprep.subr.mxu0 0.0
    %227 = vmatpush1.msra.mxu0 0.0
    %228 = vmatprep.subr.mxu0 0.0
    %229 = vmatpush1.msra.mxu0 0.0
    %230 = vmatprep.subr.mxu0 0.0
    %231 = vmatpush1.msra.mxu0 0.0
    %232 = vmatprep.subr.mxu0 0.0
    %233 = vmatpush1.msra.mxu0 0.0
    %234 = vmatprep.subr.mxu0 0.0
    %235 = vmatpush1.msra.mxu0 0.0
    %236 = vmatprep.subr.mxu0 0.0
    %237 = vmatpush1.msra.mxu0 0.0
    %238 = vmatprep.subr.mxu0 0.0
    %239 = vmatpush1.msra.mxu0 0.0
    %240 = vmatprep.subr.mxu0 0.0
    %241 = vmatpush1.msra.mxu0 0.0
    %242 = vmatprep.subr.mxu0 0.0
    %243 = vmatpush1.msra.mxu0 0.0
    %244 = vmatprep.subr.mxu0 0.0
    %245 = vmatpush1.msra.mxu0 0.0
    %246 = vmatprep.subr.mxu0 0.0
    %247 = vmatpush1.msra.mxu0 0.0
    %248 = vmatprep.subr.mxu0 0.0
    %249 = vmatpush1.msra.mxu0 0.0
    %250 = vmatprep.subr.mxu0 0.0
    %251 = vmatpush1.msra.mxu0 0.0
    %252 = vmatprep.subr.mxu0 0.0
    %253 = vmatpush1.msra.mxu0 0.0
    %254 = vmatprep.mubr.f32.mxu0 0.0
    %255 = vmatmul.mubr.f32.gmra.mrb[0].mxu0 %v185
    %v256 = vpop.f32.mrb[0].mxu0
    %v257 = vadd.f32 %v189, %v256
    %v258 = vpop.f32.mrb[0].mxu0
    %259 = vdwg.mxu0
    %vm260 = vcmask 15360
    %261 = vst.msk [vmem:[%s2] sm:$0xff] %vm260, %v257
    // Predicated region
    $region14: #{qnetwork_forward.1} parent=1 // pred_check
      _
    $region15: #{qnetwork_forward.1} parent=1 // pred_check_branch
      %263 = sbr.rel (0) target = $region17
    $region16: #{qnetwork_forward.1} parent=1 // pred_region
      _
    $region17: #{qnetwork_forward.1} parent=1 // pred_fallthru
      _
    // Predicated region
    $region18: #{qnetwork_forward.1} parent=1 // pred_check
      _
    $region19: #{qnetwork_forward.1} parent=1 // pred_check_branch
      %265 = sbr.rel (0) target = $region21
    $region20: #{qnetwork_forward.1} parent=1 // pred_region
      _
    $region21: #{qnetwork_forward.1} parent=1 // pred_fallthru
      _
    %266 = vsyncpa [#allocation3], 1

</llo_original>
